<compile_context>
chip_gen: v7x
topology: tpu7x:2x2x1
jax: 0.10.0
libtpu: 0.0.40
codegen_flags: <defaults>
</compile_context>

<pallas_src>
import math
import jax
import jax.numpy as jnp
from jax.experimental import pallas as pl
from jax.experimental.pallas import tpu as pltpu

# ---- small demo shapes consistent with the module ----
B = 2          # batch
S = 8          # seq_len
D = 32         # d_model
MAX_LEN = 64   # small max_len for the demo buffer (torch default is 5000)


# ---------------------------------------------------------------------------
# Kernel: out[b, s, :] = x[b, s, :] + pe[b, :]   (pe broadcast over the seq axis)
# Single invocation; full arrays are one VMEM block each.
# ---------------------------------------------------------------------------
def _pe_add_kernel(x_ref, pe_ref, o_ref):
    # x: (B, S, D), pe: (B, 1, D) — jnp broadcasting handles the seq-axis expansion in-register.
    o_ref[...] = x_ref[...] + pe_ref[...]


def make_pe_table(max_len: int, d_model: int) -> jnp.ndarray:
    """Equivalent of the torch register_buffer built in __init__ (shape [max_len, d_model])."""
    position = jnp.arange(max_len, dtype=jnp.float32)[:, None]                    # (max_len, 1)
    div_term = jnp.exp(jnp.arange(0, d_model, 2, dtype=jnp.float32)
                       * (-math.log(10000.0) / d_model))                          # (d_model//2,)
    angles = position * div_term                                                  # (max_len, d_model//2)
    pe = jnp.zeros((max_len, d_model), jnp.float32)
    pe = pe.at[:, 0::2].set(jnp.sin(angles))
    pe = pe.at[:, 1::2].set(jnp.cos(angles))
    return pe


def positional_encoding(x: jnp.ndarray, pe_table: jnp.ndarray) -> jnp.ndarray:
    """x: [B, S, D] f32; pe_table: [max_len, D] f32 (constant buffer)."""
    b, s, d = x.shape
    # torch: self.pe[:x.size(0), :] has shape [b, 1, d_model] — sliced by the batch size.
    pe_slice = jax.lax.slice(pe_table, (0, 0), (b, d))[:, None, :]                # (b, 1, d)

    return pl.pallas_call(
        _pe_add_kernel,
        out_shape=jax.ShapeDtypeStruct((b, s, d), x.dtype),
        grid=(1,),  # single step: total data < 3 KiB, fixed launch cost dominates any tiling
        in_specs=[
            pl.BlockSpec((b, s, d), lambda i: (0, 0, 0)),   # x, whole array in VMEM
            pl.BlockSpec((b, 1, d), lambda i: (0, 0, 0)),   # pe slice, whole array in VMEM
        ],
        out_specs=pl.BlockSpec((b, s, d), lambda i: (0, 0, 0)),
        compiler_params=pltpu.CompilerParams(dimension_semantics=("arbitrary",)),
    )(x, pe_slice)


# ---------------------------------------------------------------------------
# Pure-JAX reference mirroring the PyTorch forward (dropout = identity / eval mode).
# ---------------------------------------------------------------------------
def _reference(x, pe_table):
    b = x.shape[0]
    return x + pe_table[:b][:, None, :]


if __name__ == "__main__":
    key = jax.random.PRNGKey(0)
    x = jax.random.normal(key, (B, S, D), jnp.float32)

    pe_table = make_pe_table(MAX_LEN, D)     # built once, like register_buffer in __init__

    out = positional_encoding(x, pe_table)
    out = jax.block_until_ready(out)

    ref = _reference(x, pe_table)
    assert out.shape == (B, S, D)
    assert jnp.allclose(out, ref, atol=1e-6, rtol=1e-6), "mismatch vs JAX reference"

    print("KERNEL_OK")
</pallas_src>

<mosaic_0001>
module attributes {stable_mosaic.version = 11 : i64} {
  func.func @_pe_add_kernel(%arg0: i32, %arg1: memref<2x8x32xf32, #tpu.memory_space<vmem>>, %arg2: memref<2x1x32xf32, #tpu.memory_space<vmem>>, %arg3: memref<2x8x32xf32, #tpu.memory_space<vmem>>) attributes {dimension_semantics = [#tpu.dimension_semantics<arbitrary>], iteration_bounds = array<i64: 1>, scalar_prefetch = 0 : i64, scratch_operands = 0 : i64, tpu.core_type = #tpu.core_type<tc>, window_params = [{pipeline_mode = #tpu.pipeline_mode<synchronous>, transform_indices = @transform_0, window_bounds = array<i64: 2, 8, 32>}, {pipeline_mode = #tpu.pipeline_mode<synchronous>, transform_indices = @transform_1, window_bounds = array<i64: 2, 1, 32>}, {pipeline_mode = #tpu.pipeline_mode<synchronous>, transform_indices = @transform_2, window_bounds = array<i64: 2, 8, 32>}]} {
    %c0 = arith.constant 0 : index
    %c0_0 = arith.constant 0 : index
    %c0_1 = arith.constant 0 : index
    %0 = vector.load %arg1[%c0, %c0_0, %c0_1] : memref<2x8x32xf32, #tpu.memory_space<vmem>>, vector<2x8x32xf32>
    %c0_2 = arith.constant 0 : index
    %c0_3 = arith.constant 0 : index
    %c0_4 = arith.constant 0 : index
    %1 = vector.load %arg2[%c0_2, %c0_3, %c0_4] : memref<2x1x32xf32, #tpu.memory_space<vmem>>, vector<2x1x32xf32>
    %2 = vector.broadcast %1 : vector<2x1x32xf32> to vector<2x8x32xf32>
    %3 = arith.addf %0, %2 : vector<2x8x32xf32>
    %c0_5 = arith.constant 0 : index
    %c0_6 = arith.constant 0 : index
    %c0_7 = arith.constant 0 : index
    %4 = vector.load %arg3[%c0_5, %c0_6, %c0_7] : memref<2x8x32xf32, #tpu.memory_space<vmem>>, vector<2x8x32xf32>
    tpu.vector_store %arg3[%c0_5, %c0_6, %c0_7], %3 {strides = array<i32>} : memref<2x8x32xf32, #tpu.memory_space<vmem>>, vector<2x8x32xf32>,
    return
  }
  func.func @transform_0(%arg0: i32) -> (i32, i32, i32) {
    %c0_i32 = arith.constant 0 : i32
    %c0_i32_0 = arith.constant 0 : i32
    %c0_i32_1 = arith.constant 0 : i32
    %c0_i32_2 = arith.constant 0 : i32
    return %c0_i32, %c0_i32_0, %c0_i32_1 : i32, i32, i32
  }
  func.func @transform_1(%arg0: i32) -> (i32, i32, i32) {
    %c0_i32 = arith.constant 0 : i32
    %c0_i32_0 = arith.constant 0 : i32
    %c0_i32_1 = arith.constant 0 : i32
    %c0_i32_2 = arith.constant 0 : i32
    return %c0_i32, %c0_i32_0, %c0_i32_1 : i32, i32, i32
  }
  func.func @transform_2(%arg0: i32) -> (i32, i32, i32) {
    %c0_i32 = arith.constant 0 : i32
    %c0_i32_0 = arith.constant 0 : i32
    %c0_i32_1 = arith.constant 0 : i32
    %c0_i32_2 = arith.constant 0 : i32
    return %c0_i32, %c0_i32_0, %c0_i32_1 : i32, i32, i32
  }
}

</mosaic_0001>

<llo_original>
// kernel: tpu_custom_call.1
$region0: #{tpu_custom_call.1}
  #allocation0 [shape = 'u32[]', space=smem, size = 0x4, offset = 0x4, fixed_abs, tag = 'smem constant byte address 0x4 - core index']
  #allocation1 [shape = 'u32[144,128]{1,0:T(1,128)}', space=vmem, size = 0x12000, scoped, tag = 'internal scratch']
  %s0 = inlined_call_operand.hbm [shape: f32[2,8,32], index: 0, kind: input, shape index: {}]
  %s1 = inlined_call_operand.vmem [shape: f32[2,1,32], index: 1, kind: input, shape index: {}]
  %s2 = inlined_call_operand.hbm [shape: f32[2,8,32], index: 2, kind: output, shape index: {}]
  %s3 = sld [smem:[#allocation0]]
  $region22: #{tpu_custom_call.1} parent=0
    _
  %s5 = ssub.s32 1, %s3
  %s6 = scalar_select 0, %s5, %s3
  $region1: #{tpu_custom_call.1} parent=0
    #allocation2 [shape = 'u8[8192]{0}', space=vmem, size = 0x2000, scoped, tag = 'input window, operand 0, single buffered']
    #allocation3 [shape = 's32[1]{0}', space=sflag, size = 0x4, scoped, tag = 'scoped memory for tpu_custom_call.1']
    #allocation4 [shape = 's32[1]{0}', space=sflag, size = 0x4, scoped, tag = 'scoped memory for tpu_custom_call.1']
    #allocation5 [shape = 'u8[8192]{0}', space=vmem, size = 0x2000, scoped, tag = 'output window, operand 0, single buffered']
    %7 = vsyncpa [#allocation3], 0
    %8 = vsyncpa [#allocation4], 0
    // Predicated region
    $region2: #{tpu_custom_call.1} parent=1 // pred_check
      _
    $region3: #{tpu_custom_call.1} parent=1 // pred_check_branch
      %10 = sbr.rel (0) target = $region5
    $region4: #{tpu_custom_call.1} parent=1 // pred_region
      %s12 = ssub.s32 256, 256
      %13 = vsyncadd [#allocation3], %s12
      %s14 = sshll.u32 [#allocation2], 4
      %s15 = int_to_ptr.vmem [resolvable:$true] %s14
      %20 = dma.hbm_to_vmem [thread:$0]  %s0, 256, %s15, [#allocation3], 128, 128, 8
    $region5: #{tpu_custom_call.1} parent=1 // pred_fallthru
      _
    // Predicated region
    $region6: #{tpu_custom_call.1} parent=1 // pred_check
      _
    $region7: #{tpu_custom_call.1} parent=1 // pred_check_branch
      %22 = sbr.rel (0) target = $region9
    $region8: #{tpu_custom_call.1} parent=1 // pred_region
      _
    $region9: #{tpu_custom_call.1} parent=1 // pred_fallthru
      _
    // Predicated region
    $region10: #{tpu_custom_call.1} parent=1 // pred_check
      _
    $region11: #{tpu_custom_call.1} parent=1 // pred_check_branch
      %24 = sbr.rel (0) target = $region13
    $region12: #{tpu_custom_call.1} parent=1 // pred_region
      %25 = dma.done [#allocation3], 256
    $region13: #{tpu_custom_call.1} parent=1 // pred_fallthru
      _
    %v26 = vld [vmem:[#allocation2] sm:$0xff]
    %v27 = vld [vmem:[#allocation2 + $0x8] sm:$0xff]
    %v28 = vld [vmem:[%s1] sm:$0x1]
    %v29 = vld [vmem:[%s1 + $0x1] sm:$0x1]
    %v32 = vlaneseq
    %v33 = vshrl.u32 %v32, 7
    %v34 = vsub.s32 0, %v33
    %v35 = vrot.slane %v28, %v34
    %v36 = vlaneseq
    %v37 = vshrl.u32 %v36, 7
    %v38 = vsub.s32 0, %v37
    %v39 = vrot.slane %v29, %v38
    %v42 = vadd.f32 %v26, %v35
    %v43 = vadd.f32 %v27, %v39
    %vm44 = vcmask 261120
    %45 = vst.msk [vmem:[#allocation5] sm:$0xff] %vm44, %v42
    %46 = vst.msk [vmem:[#allocation5 + $0x8] sm:$0xff] %vm44, %v43
    // Predicated region
    $region14: #{tpu_custom_call.1} parent=1 // pred_check
      _
    $region15: #{tpu_custom_call.1} parent=1 // pred_check_branch
      %48 = sbr.rel (0) target = $region17
    $region16: #{tpu_custom_call.1} parent=1 // pred_region
      %s50 = ssub.s32 256, 256
      %51 = vsyncadd [#allocation4], %s50
      %s52 = sshll.u32 [#allocation5], 4
      %s53 = int_to_ptr.vmem [resolvable:$true] %s52
      %58 = dma.vmem_to_hbm [thread:$0]  %s53, 256, %s2, [#allocation4], 128, 128, 8
    $region17: #{tpu_custom_call.1} parent=1 // pred_fallthru
      _
    // Predicated region
    $region18: #{tpu_custom_call.1} parent=1 // pred_check
      _
    $region19: #{tpu_custom_call.1} parent=1 // pred_check_branch
      %60 = sbr.rel (0) target = $region21
    $region20: #{tpu_custom_call.1} parent=1 // pred_region
      %61 = dma.done [#allocation4], 256
    $region21: #{tpu_custom_call.1} parent=1 // pred_fallthru
      _
    %62 = vsyncpa [#allocation3], 1
    %63 = vsyncpa [#allocation4], 1

</llo_original>
